<compile_context>
chip_gen: v6e
topology: v6e:2x2x1
jax: 0.10.0
libtpu: 0.0.40
codegen_flags: <defaults>
</compile_context>

<pallas_src>
import functools

import jax
import jax.numpy as jnp
from jax import lax
from jax.experimental import pallas as pl
from jax.experimental.pallas import tpu as pltpu


def _round_up(x: int, m: int) -> int:
    return ((x + m - 1) // m) * m


def _pairwise_ranking_kernel(pred_col_ref, tgt_col_ref, pred_row_ref,
                             tgt_row_ref, out_ref, acc_ref, *,
                             n_valid, n_total, tm, tk):
    i = pl.program_id(0)          # row-block index  ("parallel")
    j = pl.program_id(1)          # col-block index  ("arbitrary", innermost)
    nj = pl.num_programs(1)

    # Fresh accumulator for every row block.
    @pl.when(j == 0)
    def _():
        acc_ref[...] = jnp.zeros_like(acc_ref)

    p_i = pred_col_ref[...]       # (tm, 1)  -- pre-transposed in the wrapper
    t_i = tgt_col_ref[...]        # (tm, 1)
    p_j = pred_row_ref[...]       # (1, tk)  -- lane-major
    t_j = tgt_row_ref[...]        # (1, tk)

    # relu(-(p_i - p_j) * (t_i - t_j)) == relu((p_i - p_j) * (t_j - t_i))
    pred_diff = p_i - p_j                      # (tm, tk) via broadcast
    tgt_diff_neg = t_j - t_i                   # negation folded in
    prod = jnp.maximum(pred_diff * tgt_diff_neg, 0.0)

    # Diagonal pairs contribute exactly 0 (both diffs are 0), so the eye-mask
    # of the reference module is a mathematical no-op and is never applied.
    if n_valid == n_total:
        # No padding at all: pure hot path, no masks compiled in.
        acc_ref[...] += prod
    else:
        needs_mask = ((i + 1) * tm > n_valid) | ((j + 1) * tk > n_valid)

        @pl.when(jnp.logical_not(needs_mask))
        def _():
            # Interior blocks: just accumulate.
            acc_ref[...] += prod

        @pl.when(needs_mask)
        def _():
            # Edge blocks only: zero out padded rows / cols.
            row_idx = i * tm + lax.broadcasted_iota(jnp.int32, (tm, 1), 0)
            col_idx = j * tk + lax.broadcasted_iota(jnp.int32, (1, tk), 1)
            row_ok = (row_idx < n_valid).astype(jnp.float32)   # (tm, 1)
            col_ok = (col_idx < n_valid).astype(jnp.float32)   # (1, tk)
            acc_ref[...] += prod * row_ok * col_ok

    # One cross-lane reduce per row block, written as a broadcast scalar into
    # this row block's lane-dense output tile.
    @pl.when(j == nj - 1)
    def _():
        total = jnp.sum(acc_ref[...])
        out_ref[...] = jnp.full(out_ref.shape, total, dtype=out_ref.dtype)


def pairwise_ranking_loss(pred: jax.Array, target: jax.Array,
                          threshold: float = 0.0) -> jax.Array:
    """Pallas TPU implementation of PairwiseRankingLoss.forward.

    pred, target: 1-D arrays of shape (N,).  Returns a float32 scalar.
    Note: `threshold` is stored but unused in the reference forward pass.
    """
    assert pred.ndim == 1 and target.shape == pred.shape
    n = pred.shape[0]

    # Tile-size / padding selection (static, based on N).
    n_pad128 = _round_up(n, 128)
    if n_pad128 <= 512:
        n_pad, tm, tk = n_pad128, n_pad128, n_pad128          # single block
    elif n_pad128 <= 2048:
        n_pad = _round_up(n, 512)
        tm, tk = 512, n_pad                                   # (512, Np) blocks
    else:
        n_pad = _round_up(n, 2048)
        tm, tk = 512, 2048                                    # (512, 2048) blocks

    pred_f = pred.astype(jnp.float32)
    tgt_f = target.astype(jnp.float32)
    pred_pad = jnp.zeros((n_pad,), jnp.float32).at[:n].set(pred_f)
    tgt_pad = jnp.zeros((n_pad,), jnp.float32).at[:n].set(tgt_f)

    # Row ("i") operand pre-transposed once in XLA; column ("j") operand
    # stays lane-major.
    pred_col = pred_pad[:, None]   # (Np, 1)
    tgt_col = tgt_pad[:, None]     # (Np, 1)
    pred_row = pred_pad[None, :]   # (1, Np)
    tgt_row = tgt_pad[None, :]     # (1, Np)

    n_row_blocks = n_pad // tm
    n_col_blocks = n_pad // tk

    kernel = functools.partial(_pairwise_ranking_kernel,
                               n_valid=n, n_total=n_pad, tm=tm, tk=tk)

    partials = pl.pallas_call(
        kernel,
        out_shape=jax.ShapeDtypeStruct((n_row_blocks, 8, 128), jnp.float32),
        grid_spec=pltpu.PrefetchScalarGridSpec(
            num_scalar_prefetch=0,
            grid=(n_row_blocks, n_col_blocks),
            in_specs=[
                pl.BlockSpec((tm, 1), lambda i, j: (i, 0)),   # pred rows (i)
                pl.BlockSpec((tm, 1), lambda i, j: (i, 0)),   # target rows (i)
                pl.BlockSpec((1, tk), lambda i, j: (0, j)),   # pred cols (j)
                pl.BlockSpec((1, tk), lambda i, j: (0, j)),   # target cols (j)
            ],
            out_specs=pl.BlockSpec((1, 8, 128), lambda i, j: (i, 0, 0)),
            scratch_shapes=[pltpu.VMEM((tm, tk), jnp.float32)],
        ),
        compiler_params=pltpu.CompilerParams(
            dimension_semantics=("parallel", "arbitrary"),
            vmem_limit_bytes=48 * 1024 * 1024),
    )(pred_col, tgt_col, pred_row, tgt_row)

    # Each row block broadcast its scalar partial over an (8, 128) tile;
    # pick one lane per row block and sum.
    return jnp.sum(partials[:, 0, 0])


def _reference(pred, target):
    pred_diff = pred[:, None] - pred[None, :]
    target_diff = target[:, None] - target[None, :]
    prod = jnp.maximum(-(pred_diff * target_diff), 0.0)
    mask = 1.0 - jnp.eye(pred.shape[0], dtype=jnp.float32)
    return jnp.sum(prod * mask)


if __name__ == "__main__":
    key = jax.random.PRNGKey(0)
    k1, k2 = jax.random.split(key)
    N = 8  # small sequence of scores / labels
    pred = jax.random.normal(k1, (N,), dtype=jnp.float32)
    target = jax.random.normal(k2, (N,), dtype=jnp.float32)

    loss = pairwise_ranking_loss(pred, target)
    loss = jax.block_until_ready(loss)

    ref = _reference(pred, target)
    assert jnp.allclose(loss, ref, rtol=1e-5, atol=1e-5), (loss, ref)
    print("KERNEL_OK")
</pallas_src>

<mosaic_0001>
module attributes {stable_mosaic.version = 11 : i64} {
  func.func @_pairwise_ranking_kernel(%arg0: i32, %arg1: i32, %arg2: memref<128x1xf32, #tpu.memory_space<vmem>>, %arg3: memref<128x1xf32, #tpu.memory_space<vmem>>, %arg4: memref<1x128xf32, #tpu.memory_space<vmem>>, %arg5: memref<1x128xf32, #tpu.memory_space<vmem>>, %arg6: memref<1x8x128xf32, #tpu.memory_space<vmem>>, %arg7: memref<128x128xf32, #tpu.memory_space<vmem>>) attributes {dimension_semantics = [#tpu.dimension_semantics<parallel>, #tpu.dimension_semantics<arbitrary>], iteration_bounds = array<i64: 1, 1>, scalar_prefetch = 0 : i64, scratch_operands = 1 : i64, tpu.core_type = #tpu.core_type<tc>, window_params = [{transform_indices = @transform_0, window_bounds = array<i64: 128, 1>}, {transform_indices = @transform_1, window_bounds = array<i64: 128, 1>}, {transform_indices = @transform_2, window_bounds = array<i64: 1, 128>}, {transform_indices = @transform_3, window_bounds = array<i64: 1, 128>}, {transform_indices = @transform_4, window_bounds = array<i64: 1, 8, 128>}]} {
    %c0_i32 = arith.constant 0 : i32
    %0 = arith.cmpi eq, %arg1, %c0_i32 : i32
    %1 = arith.extui %0 : i1 to i32
    %c0_i32_0 = arith.constant 0 : i32
    %2 = arith.cmpi ne, %1, %c0_i32_0 : i32
    scf.if %2 {
      %cst_15 = arith.constant 0.000000e+00 : f32
      %31 = vector.broadcast %cst_15 : f32 to vector<128x128xf32>
      %c0_16 = arith.constant 0 : index
      %c0_17 = arith.constant 0 : index
      %32 = vector.load %arg7[%c0_16, %c0_17] : memref<128x128xf32, #tpu.memory_space<vmem>>, vector<128x128xf32>
      tpu.vector_store %arg7[%c0_16, %c0_17], %31 {strides = array<i32>} : memref<128x128xf32, #tpu.memory_space<vmem>>, vector<128x128xf32>,
    } else {
    }
    %c0 = arith.constant 0 : index
    %c0_1 = arith.constant 0 : index
    %3 = vector.load %arg2[%c0, %c0_1] : memref<128x1xf32, #tpu.memory_space<vmem>>, vector<128x1xf32>
    %c0_2 = arith.constant 0 : index
    %c0_3 = arith.constant 0 : index
    %4 = vector.load %arg3[%c0_2, %c0_3] : memref<128x1xf32, #tpu.memory_space<vmem>>, vector<128x1xf32>
    %c0_4 = arith.constant 0 : index
    %c0_5 = arith.constant 0 : index
    %5 = vector.load %arg4[%c0_4, %c0_5] : memref<1x128xf32, #tpu.memory_space<vmem>>, vector<1x128xf32>
    %c0_6 = arith.constant 0 : index
    %c0_7 = arith.constant 0 : index
    %6 = vector.load %arg5[%c0_6, %c0_7] : memref<1x128xf32, #tpu.memory_space<vmem>>, vector<1x128xf32>
    %7 = vector.broadcast %3 : vector<128x1xf32> to vector<128x128xf32>
    %8 = vector.broadcast %5 : vector<1x128xf32> to vector<128x128xf32>
    %9 = arith.subf %7, %8 : vector<128x128xf32>
    %10 = vector.broadcast %6 : vector<1x128xf32> to vector<128x128xf32>
    %11 = vector.broadcast %4 : vector<128x1xf32> to vector<128x128xf32>
    %12 = arith.subf %10, %11 : vector<128x128xf32>
    %13 = arith.mulf %9, %12 : vector<128x128xf32>
    %cst = arith.constant 0.000000e+00 : f32
    %14 = vector.broadcast %cst : f32 to vector<128x128xf32>
    %15 = arith.maximumf %13, %14 : vector<128x128xf32>
    %c1_i32 = arith.constant 1 : i32
    %16 = arith.addi %arg0, %c1_i32 : i32
    %c128_i32 = arith.constant 128 : i32
    %17 = arith.muli %16, %c128_i32 : i32
    %c8_i32 = arith.constant 8 : i32
    %18 = arith.cmpi sgt, %17, %c8_i32 : i32
    %c1_i32_8 = arith.constant 1 : i32
    %19 = arith.addi %arg1, %c1_i32_8 : i32
    %c128_i32_9 = arith.constant 128 : i32
    %20 = arith.muli %19, %c128_i32_9 : i32
    %c8_i32_10 = arith.constant 8 : i32
    %21 = arith.cmpi sgt, %20, %c8_i32_10 : i32
    %22 = arith.ori %18, %21 : i1
    %true = arith.constant true
    %23 = arith.xori %22, %true : i1
    %24 = arith.extui %23 : i1 to i32
    %c0_i32_11 = arith.constant 0 : i32
    %25 = arith.cmpi ne, %24, %c0_i32_11 : i32
    scf.if %25 {
      %c0_15 = arith.constant 0 : index
      %c0_16 = arith.constant 0 : index
      %31 = vector.load %arg7[%c0_15, %c0_16] : memref<128x128xf32, #tpu.memory_space<vmem>>, vector<128x128xf32>
      %32 = arith.addf %31, %15 : vector<128x128xf32>
      %c0_17 = arith.constant 0 : index
      %c0_18 = arith.constant 0 : index
      %33 = vector.load %arg7[%c0_17, %c0_18] : memref<128x128xf32, #tpu.memory_space<vmem>>, vector<128x128xf32>
      tpu.vector_store %arg7[%c0_17, %c0_18], %32 {strides = array<i32>} : memref<128x128xf32, #tpu.memory_space<vmem>>, vector<128x128xf32>,
    } else {
    }
    %26 = arith.extui %22 : i1 to i32
    %c0_i32_12 = arith.constant 0 : i32
    %27 = arith.cmpi ne, %26, %c0_i32_12 : i32
    scf.if %27 {
      %c128_i32_15 = arith.constant 128 : i32
      %31 = arith.muli %arg0, %c128_i32_15 : i32
      %32 = tpu.iota {dimensions = array<i32: 0>} : vector<128x1xi32>
      %33 = vector.broadcast %31 : i32 to vector<128x1xi32>
      %34 = arith.addi %33, %32 : vector<128x1xi32>
      %c128_i32_16 = arith.constant 128 : i32
      %35 = arith.muli %arg1, %c128_i32_16 : i32
      %36 = tpu.iota {dimensions = array<i32: 1>} : vector<1x128xi32>
      %37 = vector.broadcast %35 : i32 to vector<1x128xi32>
      %38 = arith.addi %37, %36 : vector<1x128xi32>
      %c8_i32_17 = arith.constant 8 : i32
      %39 = vector.broadcast %c8_i32_17 : i32 to vector<128x1xi32>
      %40 = arith.cmpi slt, %34, %39 : vector<128x1xi32>
      %41 = arith.extui %40 : vector<128x1xi1> to vector<128x1xi32>
      %42 = arith.sitofp %41 : vector<128x1xi32> to vector<128x1xf32>
      %c8_i32_18 = arith.constant 8 : i32
      %43 = vector.broadcast %c8_i32_18 : i32 to vector<1x128xi32>
      %44 = arith.cmpi slt, %38, %43 : vector<1x128xi32>
      %45 = arith.extui %44 : vector<1x128xi1> to vector<1x128xi32>
      %46 = arith.sitofp %45 : vector<1x128xi32> to vector<1x128xf32>
      %c0_19 = arith.constant 0 : index
      %c0_20 = arith.constant 0 : index
      %47 = vector.load %arg7[%c0_19, %c0_20] : memref<128x128xf32, #tpu.memory_space<vmem>>, vector<128x128xf32>
      %48 = vector.broadcast %42 : vector<128x1xf32> to vector<128x128xf32>
      %49 = arith.mulf %15, %48 : vector<128x128xf32>
      %50 = vector.broadcast %46 : vector<1x128xf32> to vector<128x128xf32>
      %51 = arith.mulf %49, %50 : vector<128x128xf32>
      %52 = arith.addf %47, %51 : vector<128x128xf32>
      %c0_21 = arith.constant 0 : index
      %c0_22 = arith.constant 0 : index
      %53 = vector.load %arg7[%c0_21, %c0_22] : memref<128x128xf32, #tpu.memory_space<vmem>>, vector<128x128xf32>
      tpu.vector_store %arg7[%c0_21, %c0_22], %52 {strides = array<i32>} : memref<128x128xf32, #tpu.memory_space<vmem>>, vector<128x128xf32>,
    } else {
    }
    %c0_i32_13 = arith.constant 0 : i32
    %28 = arith.cmpi eq, %arg1, %c0_i32_13 : i32
    %29 = arith.extui %28 : i1 to i32
    %c0_i32_14 = arith.constant 0 : i32
    %30 = arith.cmpi ne, %29, %c0_i32_14 : i32
    scf.if %30 {
      %c0_15 = arith.constant 0 : index
      %c0_16 = arith.constant 0 : index
      %31 = vector.load %arg7[%c0_15, %c0_16] : memref<128x128xf32, #tpu.memory_space<vmem>>, vector<128x128xf32>
      %32 = vector.shape_cast %31 : vector<128x128xf32> to vector<1x128x128xf32>
      %cst_17 = arith.constant dense<0.000000e+00> : vector<1xf32>
      %33 = vector.multi_reduction <add>, %32, %cst_17 [1, 2] : vector<1x128x128xf32> to vector<1xf32>
      %34 = vector.shape_cast %33 : vector<1xf32> to vector<1x1x1xf32>
      %35 = vector.extract %34[0, 0, 0] : f32 from vector<1x1x1xf32>
      %36 = vector.broadcast %35 : f32 to vector<1x8x128xf32>
      %c0_18 = arith.constant 0 : index
      %c0_19 = arith.constant 0 : index
      %c0_20 = arith.constant 0 : index
      %37 = vector.load %arg6[%c0_18, %c0_19, %c0_20] : memref<1x8x128xf32, #tpu.memory_space<vmem>>, vector<1x8x128xf32>
      tpu.vector_store %arg6[%c0_18, %c0_19, %c0_20], %36 {strides = array<i32>} : memref<1x8x128xf32, #tpu.memory_space<vmem>>, vector<1x8x128xf32>,
    } else {
    }
    return
  }
  func.func @transform_0(%arg0: i32, %arg1: i32) -> (i32, i32) {
    %c0_i32 = arith.constant 0 : i32
    %c0_i32_0 = arith.constant 0 : i32
    return %arg0, %c0_i32 : i32, i32
  }
  func.func @transform_1(%arg0: i32, %arg1: i32) -> (i32, i32) {
    %c0_i32 = arith.constant 0 : i32
    %c0_i32_0 = arith.constant 0 : i32
    return %arg0, %c0_i32 : i32, i32
  }
  func.func @transform_2(%arg0: i32, %arg1: i32) -> (i32, i32) {
    %c0_i32 = arith.constant 0 : i32
    %c0_i32_0 = arith.constant 0 : i32
    return %c0_i32, %arg1 : i32, i32
  }
  func.func @transform_3(%arg0: i32, %arg1: i32) -> (i32, i32) {
    %c0_i32 = arith.constant 0 : i32
    %c0_i32_0 = arith.constant 0 : i32
    return %c0_i32, %arg1 : i32, i32
  }
  func.func @transform_4(%arg0: i32, %arg1: i32) -> (i32, i32, i32) {
    %c0_i32 = arith.constant 0 : i32
    %c0_i32_0 = arith.constant 0 : i32
    %c0_i32_1 = arith.constant 0 : i32
    return %arg0, %c0_i32, %c0_i32_0 : i32, i32, i32
  }
}

</mosaic_0001>

<llo_original>
// kernel: tpu_custom_call.1
$region0: #{tpu_custom_call.1}
  #allocation0 [shape = 'u32[]', space=smem, size = 0x4, offset = 0x4, fixed_abs, tag = 'smem constant byte address 0x4 - core index']
  #allocation1 [shape = 'u32[144,128]{1,0:T(1,128)}', space=vmem, size = 0x12000, scoped, tag = 'internal scratch']
  #allocation2 [shape = 'f32[128,128]{1,0:T(8,128)}', space=vmem, size = 0x10000, scoped, tag = 'scratch operand']
  %s0 = inlined_call_operand.vmem [shape: f32[128,1], index: 0, kind: input, shape index: {}]
  %s1 = inlined_call_operand.vmem [shape: f32[128,1], index: 1, kind: input, shape index: {}]
  %s2 = inlined_call_operand.vmem [shape: f32[1,128], index: 2, kind: input, shape index: {}]
  %s3 = inlined_call_operand.vmem [shape: f32[1,128], index: 3, kind: input, shape index: {}]
  %s4 = inlined_call_operand.hbm [shape: f32[1,8,128], index: 4, kind: output, shape index: {}]
  %s5 = sld [smem:[#allocation0]]
  $region42: #{tpu_custom_call.1} parent=0
    _
  %s7 = ssub.s32 1, %s5
  %s8 = scalar_select 0, %s7, %s5
  $region1: #{tpu_custom_call.1} parent=0
    #allocation3 [shape = 'u8[4096]{0}', space=vmem, size = 0x1000, scoped, tag = 'output window, operand 0, single buffered']
    #allocation4 [shape = 's32[1]{0}', space=sflag, size = 0x4, scoped, tag = 'scoped memory for tpu_custom_call.1']
    %9 = vsyncpa [#allocation4], 0
    // Predicated region
    $region2: #{tpu_custom_call.1} parent=1 // pred_check
      _
    $region3: #{tpu_custom_call.1} parent=1 // pred_check_branch
      %11 = sbr.rel (0) target = $region5
    $region4: #{tpu_custom_call.1} parent=1 // pred_region
      _
    $region5: #{tpu_custom_call.1} parent=1 // pred_fallthru
      _
    // Predicated region
    $region6: #{tpu_custom_call.1} parent=1 // pred_check
      _
    $region7: #{tpu_custom_call.1} parent=1 // pred_check_branch
      %13 = sbr.rel (0) target = $region9
    $region8: #{tpu_custom_call.1} parent=1 // pred_region
      _
    $region9: #{tpu_custom_call.1} parent=1 // pred_fallthru
      _
    // Predicated region
    $region10: #{tpu_custom_call.1} parent=1 // pred_check
      _
    $region11: #{tpu_custom_call.1} parent=1 // pred_check_branch
      %15 = sbr.rel (0) target = $region13
    $region12: #{tpu_custom_call.1} parent=1 // pred_region
      _
    $region13: #{tpu_custom_call.1} parent=1 // pred_fallthru
      _
    // Predicated region
    $region14: #{tpu_custom_call.1} parent=1 // pred_check
      _
    $region15: #{tpu_custom_call.1} parent=1 // pred_check_branch
      %17 = sbr.rel (0) target = $region17
    $region16: #{tpu_custom_call.1} parent=1 // pred_region
      _
    $region17: #{tpu_custom_call.1} parent=1 // pred_fallthru
      _
    %p18 = scmp.eq.s32.totalorder 0, 0
    // Predicated region
    $region18: #{tpu_custom_call.1} parent=1 // pred_check
      %p19 = pneg %p18
    $region19: #{tpu_custom_call.1} parent=1 // pred_check_branch
      %21 = sbr.rel (%p19) target = $region21
    $region20: #{tpu_custom_call.1} parent=1 // pred_region
      %22 = vst [vmem:[#allocation2] sm:$0xff] 0.0
      %23 = vst [vmem:[#allocation2 + $0x8] sm:$0xff] 0.0
      %24 = vst [vmem:[#allocation2 + $0x10] sm:$0xff] 0.0
      %25 = vst [vmem:[#allocation2 + $0x18] sm:$0xff] 0.0
      %26 = vst [vmem:[#allocation2 + $0x20] sm:$0xff] 0.0
      %27 = vst [vmem:[#allocation2 + $0x28] sm:$0xff] 0.0
      %28 = vst [vmem:[#allocation2 + $0x30] sm:$0xff] 0.0
      %29 = vst [vmem:[#allocation2 + $0x38] sm:$0xff] 0.0
      %30 = vst [vmem:[#allocation2 + $0x40] sm:$0xff] 0.0
      %31 = vst [vmem:[#allocation2 + $0x48] sm:$0xff] 0.0
      %32 = vst [vmem:[#allocation2 + $0x50] sm:$0xff] 0.0
      %33 = vst [vmem:[#allocation2 + $0x58] sm:$0xff] 0.0
      %34 = vst [vmem:[#allocation2 + $0x60] sm:$0xff] 0.0
      %35 = vst [vmem:[#allocation2 + $0x68] sm:$0xff] 0.0
      %36 = vst [vmem:[#allocation2 + $0x70] sm:$0xff] 0.0
      %37 = vst [vmem:[#allocation2 + $0x78] sm:$0xff] 0.0
    $region21: #{tpu_custom_call.1} parent=1 // pred_fallthru
      _
    %v38 = vld [vmem:[%s0] sm:$0xff]
    %v39 = vld [vmem:[%s0 + $0x8] sm:$0xff]
    %v40 = vld [vmem:[%s0 + $0x10] sm:$0xff]
    %v41 = vld [vmem:[%s0 + $0x18] sm:$0xff]
    %v42 = vld [vmem:[%s0 + $0x20] sm:$0xff]
    %v43 = vld [vmem:[%s0 + $0x28] sm:$0xff]
    %v44 = vld [vmem:[%s0 + $0x30] sm:$0xff]
    %v45 = vld [vmem:[%s0 + $0x38] sm:$0xff]
    %v46 = vld [vmem:[%s0 + $0x40] sm:$0xff]
    %v47 = vld [vmem:[%s0 + $0x48] sm:$0xff]
    %v48 = vld [vmem:[%s0 + $0x50] sm:$0xff]
    %v49 = vld [vmem:[%s0 + $0x58] sm:$0xff]
    %v50 = vld [vmem:[%s0 + $0x60] sm:$0xff]
    %v51 = vld [vmem:[%s0 + $0x68] sm:$0xff]
    %v52 = vld [vmem:[%s0 + $0x70] sm:$0xff]
    %v53 = vld [vmem:[%s0 + $0x78] sm:$0xff]
    %v54 = vld [vmem:[%s1] sm:$0xff]
    %v55 = vld [vmem:[%s1 + $0x8] sm:$0xff]
    %v56 = vld [vmem:[%s1 + $0x10] sm:$0xff]
    %v57 = vld [vmem:[%s1 + $0x18] sm:$0xff]
    %v58 = vld [vmem:[%s1 + $0x20] sm:$0xff]
    %v59 = vld [vmem:[%s1 + $0x28] sm:$0xff]
    %v60 = vld [vmem:[%s1 + $0x30] sm:$0xff]
    %v61 = vld [vmem:[%s1 + $0x38] sm:$0xff]
    %v62 = vld [vmem:[%s1 + $0x40] sm:$0xff]
    %v63 = vld [vmem:[%s1 + $0x48] sm:$0xff]
    %v64 = vld [vmem:[%s1 + $0x50] sm:$0xff]
    %v65 = vld [vmem:[%s1 + $0x58] sm:$0xff]
    %v66 = vld [vmem:[%s1 + $0x60] sm:$0xff]
    %v67 = vld [vmem:[%s1 + $0x68] sm:$0xff]
    %v68 = vld [vmem:[%s1 + $0x70] sm:$0xff]
    %v69 = vld [vmem:[%s1 + $0x78] sm:$0xff]
    %v70 = vld [vmem:[%s2] sm:$0x1]
    %v71 = vld [vmem:[%s3] sm:$0x1]
    %73 = vset.pattern.permute.xlu0 0
    %74 = vperm.xlu0 %73, %v38
    %v75 = vpop.permute.xlu0 %74
    %78 = vset.pattern.permute.xlu0 0
    %79 = vperm.xlu0 %78, %v39
    %v80 = vpop.permute.xlu0 %79
    %83 = vset.pattern.permute.xlu0 0
    %84 = vperm.xlu0 %83, %v40
    %v85 = vpop.permute.xlu0 %84
    %88 = vset.pattern.permute.xlu0 0
    %89 = vperm.xlu0 %88, %v41
    %v90 = vpop.permute.xlu0 %89
    %93 = vset.pattern.permute.xlu0 0
    %94 = vperm.xlu0 %93, %v42
    %v95 = vpop.permute.xlu0 %94
    %98 = vset.pattern.permute.xlu0 0
    %99 = vperm.xlu0 %98, %v43
    %v100 = vpop.permute.xlu0 %99
    %103 = vset.pattern.permute.xlu0 0
    %104 = vperm.xlu0 %103, %v44
    %v105 = vpop.permute.xlu0 %104
    %108 = vset.pattern.permute.xlu0 0
    %109 = vperm.xlu0 %108, %v45
    %v110 = vpop.permute.xlu0 %109
    %113 = vset.pattern.permute.xlu0 0
    %114 = vperm.xlu0 %113, %v46
    %v115 = vpop.permute.xlu0 %114
    %118 = vset.pattern.permute.xlu0 0
    %119 = vperm.xlu0 %118, %v47
    %v120 = vpop.permute.xlu0 %119
    %123 = vset.pattern.permute.xlu0 0
    %124 = vperm.xlu0 %123, %v48
    %v125 = vpop.permute.xlu0 %124
    %128 = vset.pattern.permute.xlu0 0
    %129 = vperm.xlu0 %128, %v49
    %v130 = vpop.permute.xlu0 %129
    %133 = vset.pattern.permute.xlu0 0
    %134 = vperm.xlu0 %133, %v50
    %v135 = vpop.permute.xlu0 %134
    %138 = vset.pattern.permute.xlu0 0
    %139 = vperm.xlu0 %138, %v51
    %v140 = vpop.permute.xlu0 %139
    %143 = vset.pattern.permute.xlu0 0
    %144 = vperm.xlu0 %143, %v52
    %v145 = vpop.permute.xlu0 %144
    %148 = vset.pattern.permute.xlu0 0
    %149 = vperm.xlu0 %148, %v53
    %v150 = vpop.permute.xlu0 %149
    %v153 = vlaneseq
    %v154 = vshrl.u32 %v153, 7
    %v155 = vsub.s32 0, %v154
    %v156 = vrot.slane %v70, %v155
    %v158 = vsub.f32 %v75, %v156
    %v159 = vsub.f32 %v80, %v156
    %v160 = vsub.f32 %v85, %v156
    %v161 = vsub.f32 %v90, %v156
    %v162 = vsub.f32 %v95, %v156
    %v163 = vsub.f32 %v100, %v156
    %v164 = vsub.f32 %v105, %v156
    %v165 = vsub.f32 %v110, %v156
    %v166 = vsub.f32 %v115, %v156
    %v167 = vsub.f32 %v120, %v156
    %v168 = vsub.f32 %v125, %v156
    %v169 = vsub.f32 %v130, %v156
    %v170 = vsub.f32 %v135, %v156
    %v171 = vsub.f32 %v140, %v156
    %v172 = vsub.f32 %v145, %v156
    %v173 = vsub.f32 %v150, %v156
    %v175 = vlaneseq
    %v176 = vshrl.u32 %v175, 7
    %v177 = vsub.s32 0, %v176
    %v178 = vrot.slane %v71, %v177
    %181 = vset.pattern.permute.xlu0 0
    %182 = vperm.xlu0 %181, %v54
    %v183 = vpop.permute.xlu0 %182
    %186 = vset.pattern.permute.xlu0 0
    %187 = vperm.xlu0 %186, %v55
    %v188 = vpop.permute.xlu0 %187
    %191 = vset.pattern.permute.xlu0 0
    %192 = vperm.xlu0 %191, %v56
    %v193 = vpop.permute.xlu0 %192
    %196 = vset.pattern.permute.xlu0 0
    %197 = vperm.xlu0 %196, %v57
    %v198 = vpop.permute.xlu0 %197
    %201 = vset.pattern.permute.xlu0 0
    %202 = vperm.xlu0 %201, %v58
    %v203 = vpop.permute.xlu0 %202
    %206 = vset.pattern.permute.xlu0 0
    %207 = vperm.xlu0 %206, %v59
    %v208 = vpop.permute.xlu0 %207
    %211 = vset.pattern.permute.xlu0 0
    %212 = vperm.xlu0 %211, %v60
    %v213 = vpop.permute.xlu0 %212
    %216 = vset.pattern.permute.xlu0 0
    %217 = vperm.xlu0 %216, %v61
    %v218 = vpop.permute.xlu0 %217
    %221 = vset.pattern.permute.xlu0 0
    %222 = vperm.xlu0 %221, %v62
    %v223 = vpop.permute.xlu0 %222
    %226 = vset.pattern.permute.xlu0 0
    %227 = vperm.xlu0 %226, %v63
    %v228 = vpop.permute.xlu0 %227
    %231 = vset.pattern.permute.xlu0 0
    %232 = vperm.xlu0 %231, %v64
    %v233 = vpop.permute.xlu0 %232
    %236 = vset.pattern.permute.xlu0 0
    %237 = vperm.xlu0 %236, %v65
    %v238 = vpop.permute.xlu0 %237
    %241 = vset.pattern.permute.xlu0 0
    %242 = vperm.xlu0 %241, %v66
    %v243 = vpop.permute.xlu0 %242
    %246 = vset.pattern.permute.xlu0 0
    %247 = vperm.xlu0 %246, %v67
    %v248 = vpop.permute.xlu0 %247
    %251 = vset.pattern.permute.xlu0 0
    %252 = vperm.xlu0 %251, %v68
    %v253 = vpop.permute.xlu0 %252
    %256 = vset.pattern.permute.xlu0 0
    %257 = vperm.xlu0 %256, %v69
    %v258 = vpop.permute.xlu0 %257
    %v260 = vsub.f32 %v178, %v183
    %v261 = vsub.f32 %v178, %v188
    %v262 = vsub.f32 %v178, %v193
    %v263 = vsub.f32 %v178, %v198
    %v264 = vsub.f32 %v178, %v203
    %v265 = vsub.f32 %v178, %v208
    %v266 = vsub.f32 %v178, %v213
    %v267 = vsub.f32 %v178, %v218
    %v268 = vsub.f32 %v178, %v223
    %v269 = vsub.f32 %v178, %v228
    %v270 = vsub.f32 %v178, %v233
    %v271 = vsub.f32 %v178, %v238
    %v272 = vsub.f32 %v178, %v243
    %v273 = vsub.f32 %v178, %v248
    %v274 = vsub.f32 %v178, %v253
    %v275 = vsub.f32 %v178, %v258
    %v276 = vmul.f32 %v158, %v260
    %v277 = vmul.f32 %v159, %v261
    %v278 = vmul.f32 %v160, %v262
    %v279 = vmul.f32 %v161, %v263
    %v280 = vmul.f32 %v162, %v264
    %v281 = vmul.f32 %v163, %v265
    %v282 = vmul.f32 %v164, %v266
    %v283 = vmul.f32 %v165, %v267
    %v284 = vmul.f32 %v166, %v268
    %v285 = vmul.f32 %v167, %v269
    %v286 = vmul.f32 %v168, %v270
    %v287 = vmul.f32 %v169, %v271
    %v288 = vmul.f32 %v170, %v272
    %v289 = vmul.f32 %v171, %v273
    %v290 = vmul.f32 %v172, %v274
    %v291 = vmul.f32 %v173, %v275
    %v292 = vmax.f32 %v276, 0.0
    %v293 = vmax.f32 %v277, 0.0
    %v294 = vmax.f32 %v278, 0.0
    %v295 = vmax.f32 %v279, 0.0
    %v296 = vmax.f32 %v280, 0.0
    %v297 = vmax.f32 %v281, 0.0
    %v298 = vmax.f32 %v282, 0.0
    %v299 = vmax.f32 %v283, 0.0
    %v300 = vmax.f32 %v284, 0.0
    %v301 = vmax.f32 %v285, 0.0
    %v302 = vmax.f32 %v286, 0.0
    %v303 = vmax.f32 %v287, 0.0
    %v304 = vmax.f32 %v288, 0.0
    %v305 = vmax.f32 %v289, 0.0
    %v306 = vmax.f32 %v290, 0.0
    %v307 = vmax.f32 %v291, 0.0
    %s308 = sadd.s32 0, 1
    %s309 = smul.u32 %s308, 128
    %p310 = scmp.gt.s32.totalorder %s309, 8
    %s311 = sadd.s32 0, 1
    %s312 = smul.u32 %s311, 128
    %p313 = scmp.gt.s32.totalorder %s312, 8
    %p314 = por %p310, %p313
    // Predicated region
    $region22: #{tpu_custom_call.1} parent=1 // pred_check
      %p315 = pneg %p314
    $region23: #{tpu_custom_call.1} parent=1 // pred_check_branch
      %317 = sbr.rel (%p315) target = $region25
    $region24: #{tpu_custom_call.1} parent=1 // pred_region
      %s318 = smul.u32 0, 128
      %v319 = vlaneseq
      %v320 = vshrl.u32 %v319, 7
      %v321 = vadd.s32 %v320, 8
      %v322 = vadd.s32 %v320, 16
      %v323 = vadd.s32 %v320, 24
      %v324 = vadd.s32 %v320, 32
      %v325 = vadd.s32 %v320, 40
      %v326 = vadd.s32 %v320, 48
      %v327 = vadd.s32 %v320, 56
      %v328 = vadd.s32 %v320, 64
      %v329 = vadd.s32 %v320, 72
      %v330 = vadd.s32 %v320, 80
      %v331 = vadd.s32 %v320, 88
      %v332 = vadd.s32 %v320, 96
      %v333 = vadd.s32 %v320, 104
      %v334 = vadd.s32 %v320, 112
      %v335 = vadd.s32 %v320, 120
      %v336 = vstv %s318
      %v337 = vadd.s32 %v336, %v320
      %v338 = vadd.s32 %v336, %v321
      %v339 = vadd.s32 %v336, %v322
      %v340 = vadd.s32 %v336, %v323
      %v341 = vadd.s32 %v336, %v324
      %v342 = vadd.s32 %v336, %v325
      %v343 = vadd.s32 %v336, %v326
      %v344 = vadd.s32 %v336, %v327
      %v345 = vadd.s32 %v336, %v328
      %v346 = vadd.s32 %v336, %v329
      %v347 = vadd.s32 %v336, %v330
      %v348 = vadd.s32 %v336, %v331
      %v349 = vadd.s32 %v336, %v332
      %v350 = vadd.s32 %v336, %v333
      %v351 = vadd.s32 %v336, %v334
      %v352 = vadd.s32 %v336, %v335
      %s353 = smul.u32 0, 128
      %v354 = vlaneseq
      %v355 = vand.u32 %v354, 127
      %v356 = vstv %s353
      %v357 = vadd.s32 %v356, %v355
      %vm358 = vcmp.lt.s32.totalorder %v337, 8
      %vm359 = vcmp.lt.s32.totalorder %v338, 8
      %vm360 = vcmp.lt.s32.totalorder %v339, 8
      %vm361 = vcmp.lt.s32.totalorder %v340, 8
      %vm362 = vcmp.lt.s32.totalorder %v341, 8
      %vm363 = vcmp.lt.s32.totalorder %v342, 8
      %vm364 = vcmp.lt.s32.totalorder %v343, 8
      %vm365 = vcmp.lt.s32.totalorder %v344, 8
      %vm366 = vcmp.lt.s32.totalorder %v345, 8
      %vm367 = vcmp.lt.s32.totalorder %v346, 8
      %vm368 = vcmp.lt.s32.totalorder %v347, 8
      %vm369 = vcmp.lt.s32.totalorder %v348, 8
      %vm370 = vcmp.lt.s32.totalorder %v349, 8
      %vm371 = vcmp.lt.s32.totalorder %v350, 8
      %vm372 = vcmp.lt.s32.totalorder %v351, 8
      %vm373 = vcmp.lt.s32.totalorder %v352, 8
      %v374 = vsel %vm358, 1, 0
      %v375 = vsel %vm359, 1, 0
      %v376 = vsel %vm360, 1, 0
      %v377 = vsel %vm361, 1, 0
      %v378 = vsel %vm362, 1, 0
      %v379 = vsel %vm363, 1, 0
      %v380 = vsel %vm364, 1, 0
      %v381 = vsel %vm365, 1, 0
      %v382 = vsel %vm366, 1, 0
      %v383 = vsel %vm367, 1, 0
      %v384 = vsel %vm368, 1, 0
      %v385 = vsel %vm369, 1, 0
      %v386 = vsel %vm370, 1, 0
      %v387 = vsel %vm371, 1, 0
      %v388 = vsel %vm372, 1, 0
      %v389 = vsel %vm373, 1, 0
      %v390 = vcvt.s32.f32 %v374
      %v391 = vcvt.s32.f32 %v375
      %v392 = vcvt.s32.f32 %v376
      %v393 = vcvt.s32.f32 %v377
      %v394 = vcvt.s32.f32 %v378
      %v395 = vcvt.s32.f32 %v379
      %v396 = vcvt.s32.f32 %v380
      %v397 = vcvt.s32.f32 %v381
      %v398 = vcvt.s32.f32 %v382
      %v399 = vcvt.s32.f32 %v383
      %v400 = vcvt.s32.f32 %v384
      %v401 = vcvt.s32.f32 %v385
      %v402 = vcvt.s32.f32 %v386
      %v403 = vcvt.s32.f32 %v387
      %v404 = vcvt.s32.f32 %v388
      %v405 = vcvt.s32.f32 %v389
      %vm406 = vcmp.lt.s32.totalorder %v357, 8
      %v407 = vsel %vm406, 1, 0
      %v408 = vcvt.s32.f32 %v407
      %v409 = vld [vmem:[#allocation2] sm:$0xff]
      %v410 = vld [vmem:[#allocation2 + $0x8] sm:$0xff]
      %v411 = vld [vmem:[#allocation2 + $0x10] sm:$0xff]
      %v412 = vld [vmem:[#allocation2 + $0x18] sm:$0xff]
      %v413 = vld [vmem:[#allocation2 + $0x20] sm:$0xff]
      %v414 = vld [vmem:[#allocation2 + $0x28] sm:$0xff]
      %v415 = vld [vmem:[#allocation2 + $0x30] sm:$0xff]
      %v416 = vld [vmem:[#allocation2 + $0x38] sm:$0xff]
      %v417 = vld [vmem:[#allocation2 + $0x40] sm:$0xff]
      %v418 = vld [vmem:[#allocation2 + $0x48] sm:$0xff]
      %v419 = vld [vmem:[#allocation2 + $0x50] sm:$0xff]
      %v420 = vld [vmem:[#allocation2 + $0x58] sm:$0xff]
      %v421 = vld [vmem:[#allocation2 + $0x60] sm:$0xff]
      %v422 = vld [vmem:[#allocation2 + $0x68] sm:$0xff]
      %v423 = vld [vmem:[#allocation2 + $0x70] sm:$0xff]
      %v424 = vld [vmem:[#allocation2 + $0x78] sm:$0xff]
      %v425 = vmul.f32 %v292, %v390
      %v426 = vmul.f32 %v293, %v391
      %v427 = vmul.f32 %v294, %v392
      %v428 = vmul.f32 %v295, %v393
      %v429 = vmul.f32 %v296, %v394
      %v430 = vmul.f32 %v297, %v395
      %v431 = vmul.f32 %v298, %v396
      %v432 = vmul.f32 %v299, %v397
      %v433 = vmul.f32 %v300, %v398
      %v434 = vmul.f32 %v301, %v399
      %v435 = vmul.f32 %v302, %v400
      %v436 = vmul.f32 %v303, %v401
      %v437 = vmul.f32 %v304, %v402
      %v438 = vmul.f32 %v305, %v403
      %v439 = vmul.f32 %v306, %v404
      %v440 = vmul.f32 %v307, %v405
      %v441 = vmul.f32 %v425, %v408
      %v442 = vmul.f32 %v426, %v408
      %v443 = vmul.f32 %v427, %v408
      %v444 = vmul.f32 %v428, %v408
      %v445 = vmul.f32 %v429, %v408
      %v446 = vmul.f32 %v430, %v408
      %v447 = vmul.f32 %v431, %v408
      %v448 = vmul.f32 %v432, %v408
      %v449 = vmul.f32 %v433, %v408
      %v450 = vmul.f32 %v434, %v408
      %v451 = vmul.f32 %v435, %v408
      %v452 = vmul.f32 %v436, %v408
      %v453 = vmul.f32 %v437, %v408
      %v454 = vmul.f32 %v438, %v408
      %v455 = vmul.f32 %v439, %v408
      %v456 = vmul.f32 %v440, %v408
      %v457 = vadd.f32 %v409, %v441
      %v458 = vadd.f32 %v410, %v442
      %v459 = vadd.f32 %v411, %v443
      %v460 = vadd.f32 %v412, %v444
      %v461 = vadd.f32 %v413, %v445
      %v462 = vadd.f32 %v414, %v446
      %v463 = vadd.f32 %v415, %v447
      %v464 = vadd.f32 %v416, %v448
      %v465 = vadd.f32 %v417, %v449
      %v466 = vadd.f32 %v418, %v450
      %v467 = vadd.f32 %v419, %v451
      %v468 = vadd.f32 %v420, %v452
      %v469 = vadd.f32 %v421, %v453
      %v470 = vadd.f32 %v422, %v454
      %v471 = vadd.f32 %v423, %v455
      %v472 = vadd.f32 %v424, %v456
      %473 = vst [vmem:[#allocation2] sm:$0xff] %v457
      %474 = vst [vmem:[#allocation2 + $0x8] sm:$0xff] %v458
      %475 = vst [vmem:[#allocation2 + $0x10] sm:$0xff] %v459
      %476 = vst [vmem:[#allocation2 + $0x18] sm:$0xff] %v460
      %477 = vst [vmem:[#allocation2 + $0x20] sm:$0xff] %v461
      %478 = vst [vmem:[#allocation2 + $0x28] sm:$0xff] %v462
      %479 = vst [vmem:[#allocation2 + $0x30] sm:$0xff] %v463
      %480 = vst [vmem:[#allocation2 + $0x38] sm:$0xff] %v464
      %481 = vst [vmem:[#allocation2 + $0x40] sm:$0xff] %v465
      %482 = vst [vmem:[#allocation2 + $0x48] sm:$0xff] %v466
      %483 = vst [vmem:[#allocation2 + $0x50] sm:$0xff] %v467
      %484 = vst [vmem:[#allocation2 + $0x58] sm:$0xff] %v468
      %485 = vst [vmem:[#allocation2 + $0x60] sm:$0xff] %v469
      %486 = vst [vmem:[#allocation2 + $0x68] sm:$0xff] %v470
      %487 = vst [vmem:[#allocation2 + $0x70] sm:$0xff] %v471
      %488 = vst [vmem:[#allocation2 + $0x78] sm:$0xff] %v472
    $region25: #{tpu_custom_call.1} parent=1 // pred_fallthru
      _
    %p489 = pneg %p314
    // Predicated region
    $region26: #{tpu_custom_call.1} parent=1 // pred_check
      _
    $region27: #{tpu_custom_call.1} parent=1 // pred_check_branch
      %491 = sbr.rel (%p314) target = $region29
    $region28: #{tpu_custom_call.1} parent=1 // pred_region
      %v492 = vld [vmem:[#allocation2] sm:$0xff]
      %v493 = vld [vmem:[#allocation2 + $0x8] sm:$0xff]
      %v494 = vld [vmem:[#allocation2 + $0x10] sm:$0xff]
      %v495 = vld [vmem:[#allocation2 + $0x18] sm:$0xff]
      %v496 = vld [vmem:[#allocation2 + $0x20] sm:$0xff]
      %v497 = vld [vmem:[#allocation2 + $0x28] sm:$0xff]
      %v498 = vld [vmem:[#allocation2 + $0x30] sm:$0xff]
      %v499 = vld [vmem:[#allocation2 + $0x38] sm:$0xff]
      %v500 = vld [vmem:[#allocation2 + $0x40] sm:$0xff]
      %v501 = vld [vmem:[#allocation2 + $0x48] sm:$0xff]
      %v502 = vld [vmem:[#allocation2 + $0x50] sm:$0xff]
      %v503 = vld [vmem:[#allocation2 + $0x58] sm:$0xff]
      %v504 = vld [vmem:[#allocation2 + $0x60] sm:$0xff]
      %v505 = vld [vmem:[#allocation2 + $0x68] sm:$0xff]
      %v506 = vld [vmem:[#allocation2 + $0x70] sm:$0xff]
      %v507 = vld [vmem:[#allocation2 + $0x78] sm:$0xff]
      %v508 = vadd.f32 %v492, %v292
      %v509 = vadd.f32 %v493, %v293
      %v510 = vadd.f32 %v494, %v294
      %v511 = vadd.f32 %v495, %v295
      %v512 = vadd.f32 %v496, %v296
      %v513 = vadd.f32 %v497, %v297
      %v514 = vadd.f32 %v498, %v298
      %v515 = vadd.f32 %v499, %v299
      %v516 = vadd.f32 %v500, %v300
      %v517 = vadd.f32 %v501, %v301
      %v518 = vadd.f32 %v502, %v302
      %v519 = vadd.f32 %v503, %v303
      %v520 = vadd.f32 %v504, %v304
      %v521 = vadd.f32 %v505, %v305
      %v522 = vadd.f32 %v506, %v306
      %v523 = vadd.f32 %v507, %v307
      %524 = vst [vmem:[#allocation2] sm:$0xff] %v508
      %525 = vst [vmem:[#allocation2 + $0x8] sm:$0xff] %v509
      %526 = vst [vmem:[#allocation2 + $0x10] sm:$0xff] %v510
      %527 = vst [vmem:[#allocation2 + $0x18] sm:$0xff] %v511
      %528 = vst [vmem:[#allocation2 + $0x20] sm:$0xff] %v512
      %529 = vst [vmem:[#allocation2 + $0x28] sm:$0xff] %v513
      %530 = vst [vmem:[#allocation2 + $0x30] sm:$0xff] %v514
      %531 = vst [vmem:[#allocation2 + $0x38] sm:$0xff] %v515
      %532 = vst [vmem:[#allocation2 + $0x40] sm:$0xff] %v516
      %533 = vst [vmem:[#allocation2 + $0x48] sm:$0xff] %v517
      %534 = vst [vmem:[#allocation2 + $0x50] sm:$0xff] %v518
      %535 = vst [vmem:[#allocation2 + $0x58] sm:$0xff] %v519
      %536 = vst [vmem:[#allocation2 + $0x60] sm:$0xff] %v520
      %537 = vst [vmem:[#allocation2 + $0x68] sm:$0xff] %v521
      %538 = vst [vmem:[#allocation2 + $0x70] sm:$0xff] %v522
      %539 = vst [vmem:[#allocation2 + $0x78] sm:$0xff] %v523
    $region29: #{tpu_custom_call.1} parent=1 // pred_fallthru
      _
    // Predicated region
    $region30: #{tpu_custom_call.1} parent=1 // pred_check
      %p540 = pneg %p18
    $region31: #{tpu_custom_call.1} parent=1 // pred_check_branch
      %542 = sbr.rel (%p540) target = $region33
    $region32: #{tpu_custom_call.1} parent=1 // pred_region
      %v543 = vld [vmem:[#allocation2] sm:$0xff]
      %v544 = vld [vmem:[#allocation2 + $0x8] sm:$0xff]
      %v545 = vld [vmem:[#allocation2 + $0x10] sm:$0xff]
      %v546 = vld [vmem:[#allocation2 + $0x18] sm:$0xff]
      %v547 = vld [vmem:[#allocation2 + $0x20] sm:$0xff]
      %v548 = vld [vmem:[#allocation2 + $0x28] sm:$0xff]
      %v549 = vld [vmem:[#allocation2 + $0x30] sm:$0xff]
      %v550 = vld [vmem:[#allocation2 + $0x38] sm:$0xff]
      %v551 = vld [vmem:[#allocation2 + $0x40] sm:$0xff]
      %v552 = vld [vmem:[#allocation2 + $0x48] sm:$0xff]
      %v553 = vld [vmem:[#allocation2 + $0x50] sm:$0xff]
      %v554 = vld [vmem:[#allocation2 + $0x58] sm:$0xff]
      %v555 = vld [vmem:[#allocation2 + $0x60] sm:$0xff]
      %v556 = vld [vmem:[#allocation2 + $0x68] sm:$0xff]
      %v557 = vld [vmem:[#allocation2 + $0x70] sm:$0xff]
      %v558 = vld [vmem:[#allocation2 + $0x78] sm:$0xff]
      %v559 = vadd.f32 %v543, %v544
      %v560 = vadd.f32 %v559, %v545
      %v561 = vadd.f32 %v560, %v546
      %v562 = vadd.f32 %v561, %v547
      %v563 = vadd.f32 %v562, %v548
      %v564 = vadd.f32 %v563, %v549
      %v565 = vadd.f32 %v564, %v550
      %v566 = vadd.f32 %v565, %v551
      %v567 = vadd.f32 %v566, %v552
      %v568 = vadd.f32 %v567, %v553
      %v569 = vadd.f32 %v568, %v554
      %v570 = vadd.f32 %v569, %v555
      %v571 = vadd.f32 %v570, %v556
      %v572 = vadd.f32 %v571, %v557
      %v573 = vadd.f32 %v572, %v558
      %574 = vadd.xlane.f32.xlu0 %v573
      %v575 = vpop.xlane.xlu0 %574
      %v576 = vrot.slane %v575, 4
      %v577 = vadd.f32 %v575, %v576
      %v578 = vrot.slane %v577, 2
      %v579 = vadd.f32 %v577, %v578
      %v580 = vrot.slane %v579, 1
      %v581 = vadd.f32 %v579, %v580
      %s582 = vtos %v581
      %v583 = vstv %s582
      %584 = vst [vmem:[#allocation3] sm:$0xff] %v583
    $region33: #{tpu_custom_call.1} parent=1 // pred_fallthru
      _
    // Predicated region
    $region34: #{tpu_custom_call.1} parent=1 // pred_check
      _
    $region35: #{tpu_custom_call.1} parent=1 // pred_check_branch
      %586 = sbr.rel (0) target = $region37
    $region36: #{tpu_custom_call.1} parent=1 // pred_region
      %s588 = ssub.s32 128, 128
      %589 = vsyncadd [#allocation4], %s588
      %s591 = sshll.u32 [#allocation3], 4
      %s592 = int_to_ptr.vmem [resolvable:$true] %s591
      %594 = dma.vmem_to_hbm [thread:$0]  %s592, 128, %s4, [#allocation4]
    $region37: #{tpu_custom_call.1} parent=1 // pred_fallthru
      _
    // Predicated region
    $region38: #{tpu_custom_call.1} parent=1 // pred_check
      _
    $region39: #{tpu_custom_call.1} parent=1 // pred_check_branch
      %596 = sbr.rel (0) target = $region41
    $region40: #{tpu_custom_call.1} parent=1 // pred_region
      %597 = dma.done [#allocation4], 128
    $region41: #{tpu_custom_call.1} parent=1 // pred_fallthru
      _
    %598 = vsyncpa [#allocation4], 1

</llo_original>
